<compile_context>
chip_gen: v7x
topology: tpu7x:2x2x1
jax: 0.10.0
libtpu: 0.0.40
codegen_flags: <defaults>
</compile_context>

<pallas_src>
import jax
import jax.numpy as jnp
from jax.experimental import pallas as pl
from jax.experimental.pallas import tpu as pltpu


def _slice_att_kernel(x_ref,                      # (bs, C)
                      w12_ref, b12_ref,           # (C, 2A), (1, 2A)  fused fc1||fc2
                      ws_row_ref, bscore_ref,     # (1, A), (1, 1)    fc_score (transposed)
                      wm1_ref, bm1_ref,           # (C, H), (1, H)    fc_mlp[0]
                      wm2_row_ref, bm2_ref,       # (1, H), (1, 1)    fc_mlp[2] (transposed)
                      starts_ref, ends_ref,       # (n_seg, 1) int32 segment bounds
                      out_ref):                   # (1, n_seg) lane-dense output
    bs = x_ref.shape[0]
    n_seg = out_ref.shape[1]
    A = ws_row_ref.shape[1]

    # Load and cast x exactly once.
    x = x_ref[...].astype(jnp.float32)                                    # (bs, C)

    # --- gated attention scores: one fused (bs, 2A) matmul ---
    gates = (jnp.dot(x, w12_ref[...], preferred_element_type=jnp.float32)
             + b12_ref[...])                                              # (bs, 2A)
    x_gate = jnp.tanh(gates[:, :A]) * jax.nn.sigmoid(gates[:, A:])        # (bs, A)

    # fc_score via a transposed matvec -> lane-dense scores (1, bs).
    score_row = jax.lax.dot_general(
        ws_row_ref[...], x_gate,
        dimension_numbers=(((1,), (1,)), ((), ())),
        preferred_element_type=jnp.float32) + bscore_ref[...]             # (1, bs)

    # --- all segments at once: (n_seg, bs) masked softmax, rows on lanes ---
    row_ids = jax.lax.broadcasted_iota(jnp.int32, (n_seg, bs), 1)         # (n_seg, bs)
    mask = (row_ids >= starts_ref[...]) & (row_ids < ends_ref[...])       # (n_seg, bs)

    masked = jnp.where(mask, score_row, -1e30)                            # (n_seg, bs)
    m = jnp.max(masked, axis=-1, keepdims=True)                           # (n_seg, 1)
    e = jnp.where(mask, jnp.exp(masked - m), 0.0)                         # (n_seg, bs)
    denom = jnp.sum(e, axis=-1, keepdims=True)                            # (n_seg, 1)
    # Guard empty segments (denom == 0) -> weights 0 instead of inf/NaN.
    w = e * pl.reciprocal(jnp.maximum(denom, 1e-30), approx=True)         # (n_seg, bs)

    # All pooled vectors with ONE MXU matmul.
    pooled = jnp.dot(w, x, preferred_element_type=jnp.float32)            # (n_seg, C)

    # --- fc_mlp batched over all segments ---
    h = jnp.maximum(
        jnp.dot(pooled, wm1_ref[...], preferred_element_type=jnp.float32)
        + bm1_ref[...], 0.0)                                              # (n_seg, H)
    pred_row = jnp.maximum(
        jax.lax.dot_general(
            wm2_row_ref[...], h,
            dimension_numbers=(((1,), (1,)), ((), ())),
            preferred_element_type=jnp.float32) + bm2_ref[...], 0.0)      # (1, n_seg)

    out_ref[...] = pred_row.astype(out_ref.dtype)


def slice_attention_pallas(x, seg_ends, params):
    """x: (bs, C) f32; seg_ends: (n_seg,) int32 cumulative end indices.

    Returns (n_seg, 1) predictions, matching the PyTorch module.
    """
    bs, C = x.shape
    A = params["w1"].shape[1]
    H = params["wm1"].shape[1]
    n_seg = seg_ends.shape[0]

    seg_ends = seg_ends.astype(jnp.int32)
    seg_starts = jnp.concatenate(
        [jnp.zeros((1,), jnp.int32), seg_ends[:-1]], axis=0)
    starts_col = seg_starts.reshape(n_seg, 1)
    ends_col = seg_ends.reshape(n_seg, 1)

    # Fuse the two gate projections and pre-transpose the two matvec weights.
    w12 = jnp.concatenate([params["w1"], params["w2"]], axis=1)   # (C, 2A)
    b12 = jnp.concatenate([params["b1"], params["b2"]], axis=1)   # (1, 2A)
    ws_row = params["ws"].T                                       # (1, A)
    wm2_row = params["wm2"].T                                     # (1, H)

    def full(shape):
        return pl.BlockSpec(shape, lambda i: (0,) * len(shape))

    out_row = pl.pallas_call(
        _slice_att_kernel,
        out_shape=jax.ShapeDtypeStruct((1, n_seg), jnp.float32),
        grid=(1,),
        in_specs=[
            full((bs, C)),                       # x
            full((C, 2 * A)), full((1, 2 * A)),  # fused fc1||fc2
            full((1, A)), full((1, 1)),          # fc_score (transposed) + bias
            full((C, H)), full((1, H)),          # fc_mlp[0]
            full((1, H)), full((1, 1)),          # fc_mlp[2] (transposed) + bias
            full((n_seg, 1)), full((n_seg, 1)),  # segment starts / ends
        ],
        out_specs=full((1, n_seg)),
        compiler_params=pltpu.CompilerParams(
            dimension_semantics=("arbitrary",),
            vmem_limit_bytes=32 * 1024 * 1024),
    )(x, w12, b12, ws_row, params["bs"], params["wm1"], params["bm1"],
      wm2_row, params["bm2"], starts_col, ends_col)

    return out_row.reshape(n_seg, 1)


def slice_attention_ref(x, seg_ends_list, params):
    """Plain-JAX reference matching the PyTorch forward."""
    x_v = jnp.tanh(x @ params["w1"] + params["b1"])
    x_u = jax.nn.sigmoid(x @ params["w2"] + params["b2"])
    score = ((x_v * x_u) @ params["ws"] + params["bs"])[:, 0]
    outs = []
    start = 0
    for end in seg_ends_list:
        s = jax.nn.softmax(score[start:end])
        outs.append(jnp.sum(x[start:end] * s[:, None], axis=0))
        start = end
    slice_x = jnp.stack(outs)
    h = jnp.maximum(slice_x @ params["wm1"] + params["bm1"], 0.0)
    return jnp.maximum(h @ params["wm2"] + params["bm2"], 0.0)


def init_params(key, in_channels, att_dim):
    hidden = in_channels // 8
    ks = jax.random.split(key, 10)
    scale = 0.1
    return {
        "w1": scale * jax.random.normal(ks[0], (in_channels, att_dim), jnp.float32),
        "b1": scale * jax.random.normal(ks[1], (1, att_dim), jnp.float32),
        "w2": scale * jax.random.normal(ks[2], (in_channels, att_dim), jnp.float32),
        "b2": scale * jax.random.normal(ks[3], (1, att_dim), jnp.float32),
        "ws": scale * jax.random.normal(ks[4], (att_dim, 1), jnp.float32),
        "bs": scale * jax.random.normal(ks[5], (1, 1), jnp.float32),
        "wm1": scale * jax.random.normal(ks[6], (in_channels, hidden), jnp.float32),
        "bm1": scale * jax.random.normal(ks[7], (1, hidden), jnp.float32),
        "wm2": scale * jax.random.normal(ks[8], (hidden, 1), jnp.float32),
        "bm2": scale * jax.random.normal(ks[9], (1, 1), jnp.float32),
    }


if __name__ == "__main__":
    key = jax.random.PRNGKey(0)
    k_x, k_p = jax.random.split(key)

    bs, in_channels, att_dim = 16, 32, 16
    # Cumulative segment end indices (like the PyTorch `idx` list).
    seg_ends_list = [4, 9, 13, 16]
    seg_ends = jnp.asarray(seg_ends_list, dtype=jnp.int32)

    x = jax.random.normal(k_x, (bs, in_channels), jnp.float32)
    params = init_params(k_p, in_channels, att_dim)

    out = slice_attention_pallas(x, seg_ends, params)
    out = jax.block_until_ready(out)

    ref = slice_attention_ref(x, seg_ends_list, params)
    assert out.shape == (len(seg_ends_list), 1)
    assert jnp.allclose(out, ref, atol=2e-3, rtol=2e-3), (out, ref)

    print("KERNEL_OK")
</pallas_src>

<mosaic_0001>
module attributes {stable_mosaic.version = 11 : i64} {
  func.func @_slice_att_kernel(%arg0: i32, %arg1: memref<16x32xf32, #tpu.memory_space<vmem>>, %arg2: memref<32x32xf32, #tpu.memory_space<vmem>>, %arg3: memref<1x32xf32, #tpu.memory_space<vmem>>, %arg4: memref<1x16xf32, #tpu.memory_space<vmem>>, %arg5: memref<1x1xf32, #tpu.memory_space<vmem>>, %arg6: memref<32x4xf32, #tpu.memory_space<vmem>>, %arg7: memref<1x4xf32, #tpu.memory_space<vmem>>, %arg8: memref<1x4xf32, #tpu.memory_space<vmem>>, %arg9: memref<1x1xf32, #tpu.memory_space<vmem>>, %arg10: memref<4x1xi32, #tpu.memory_space<vmem>>, %arg11: memref<4x1xi32, #tpu.memory_space<vmem>>, %arg12: memref<1x4xf32, #tpu.memory_space<vmem>>) attributes {dimension_semantics = [#tpu.dimension_semantics<arbitrary>], iteration_bounds = array<i64: 1>, scalar_prefetch = 0 : i64, scratch_operands = 0 : i64, tpu.core_type = #tpu.core_type<tc>, window_params = [{pipeline_mode = #tpu.pipeline_mode<synchronous>, transform_indices = @transform_0, window_bounds = array<i64: 16, 32>}, {pipeline_mode = #tpu.pipeline_mode<synchronous>, transform_indices = @transform_1, window_bounds = array<i64: 32, 32>}, {pipeline_mode = #tpu.pipeline_mode<synchronous>, transform_indices = @transform_2, window_bounds = array<i64: 1, 32>}, {pipeline_mode = #tpu.pipeline_mode<synchronous>, transform_indices = @transform_3, window_bounds = array<i64: 1, 16>}, {pipeline_mode = #tpu.pipeline_mode<synchronous>, transform_indices = @transform_4, window_bounds = array<i64: 1, 1>}, {pipeline_mode = #tpu.pipeline_mode<synchronous>, transform_indices = @transform_5, window_bounds = array<i64: 32, 4>}, {pipeline_mode = #tpu.pipeline_mode<synchronous>, transform_indices = @transform_6, window_bounds = array<i64: 1, 4>}, {pipeline_mode = #tpu.pipeline_mode<synchronous>, transform_indices = @transform_7, window_bounds = array<i64: 1, 4>}, {pipeline_mode = #tpu.pipeline_mode<synchronous>, transform_indices = @transform_8, window_bounds = array<i64: 1, 1>}, {pipeline_mode = #tpu.pipeline_mode<synchronous>, transform_indices = @transform_9, window_bounds = array<i64: 4, 1>}, {pipeline_mode = #tpu.pipeline_mode<synchronous>, transform_indices = @transform_10, window_bounds = array<i64: 4, 1>}, {pipeline_mode = #tpu.pipeline_mode<synchronous>, transform_indices = @transform_11, window_bounds = array<i64: 1, 4>}]} {
    %c0 = arith.constant 0 : index
    %c0_0 = arith.constant 0 : index
    %0 = vector.load %arg1[%c0, %c0_0] : memref<16x32xf32, #tpu.memory_space<vmem>>, vector<16x32xf32>
    %c0_1 = arith.constant 0 : index
    %c0_2 = arith.constant 0 : index
    %1 = vector.load %arg2[%c0_1, %c0_2] : memref<32x32xf32, #tpu.memory_space<vmem>>, vector<32x32xf32>
    %cst = arith.constant dense<0.000000e+00> : vector<16x32xf32>
    %2 = tpu.matmul %0, %1, %cst {dimension_numbers = #tpu.dot_dimension_numbers<[1], [0], [0], [1], [0, 0, 1, 1], [], []>} : vector<16x32xf32>, vector<32x32xf32>, vector<16x32xf32> -> vector<16x32xf32>
    %c0_3 = arith.constant 0 : index
    %c0_4 = arith.constant 0 : index
    %3 = vector.load %arg3[%c0_3, %c0_4] : memref<1x32xf32, #tpu.memory_space<vmem>>, vector<1x32xf32>
    %4 = vector.broadcast %3 : vector<1x32xf32> to vector<16x32xf32>
    %5 = arith.addf %2, %4 : vector<16x32xf32>
    %6 = vector.extract_strided_slice %5 {offsets = [0, 0], sizes = [16, 16], strides = [1, 1]} : vector<16x32xf32> to vector<16x16xf32>
    %7 = math.tanh %6 : vector<16x16xf32>
    %8 = vector.extract_strided_slice %5 {offsets = [0, 16], sizes = [16, 16], strides = [1, 1]} : vector<16x32xf32> to vector<16x16xf32>
    %9 = arith.negf %8 : vector<16x16xf32>
    %10 = math.exp %9 : vector<16x16xf32>
    %cst_5 = arith.constant 1.000000e+00 : f32
    %11 = vector.broadcast %cst_5 : f32 to vector<16x16xf32>
    %12 = arith.addf %11, %10 : vector<16x16xf32>
    %13 = arith.divf %11, %12 : vector<16x16xf32>
    %14 = arith.mulf %7, %13 : vector<16x16xf32>
    %c0_6 = arith.constant 0 : index
    %c0_7 = arith.constant 0 : index
    %15 = vector.load %arg4[%c0_6, %c0_7] : memref<1x16xf32, #tpu.memory_space<vmem>>, vector<1x16xf32>
    %cst_8 = arith.constant dense<0.000000e+00> : vector<1x16xf32>
    %16 = tpu.matmul %15, %14, %cst_8 {dimension_numbers = #tpu.dot_dimension_numbers<[1], [1], [0], [0], [0, 0, 1, 0], [], []>} : vector<1x16xf32>, vector<16x16xf32>, vector<1x16xf32> -> vector<1x16xf32>
    %c0_9 = arith.constant 0 : index
    %c0_10 = arith.constant 0 : index
    %17 = vector.load %arg5[%c0_9, %c0_10] : memref<1x1xf32, #tpu.memory_space<vmem>>, vector<1x1xf32>
    %18 = vector.broadcast %17 : vector<1x1xf32> to vector<1x16xf32>
    %19 = arith.addf %16, %18 : vector<1x16xf32>
    %20 = tpu.iota {dimensions = array<i32: 1>} : vector<4x16xi32>
    %c0_11 = arith.constant 0 : index
    %c0_12 = arith.constant 0 : index
    %21 = vector.load %arg10[%c0_11, %c0_12] : memref<4x1xi32, #tpu.memory_space<vmem>>, vector<4x1xi32>
    %22 = vector.broadcast %21 : vector<4x1xi32> to vector<4x16xi32>
    %23 = arith.cmpi sge, %20, %22 : vector<4x16xi32>
    %c0_13 = arith.constant 0 : index
    %c0_14 = arith.constant 0 : index
    %24 = vector.load %arg11[%c0_13, %c0_14] : memref<4x1xi32, #tpu.memory_space<vmem>>, vector<4x1xi32>
    %25 = vector.broadcast %24 : vector<4x1xi32> to vector<4x16xi32>
    %26 = arith.cmpi slt, %20, %25 : vector<4x16xi32>
    %27 = arith.andi %23, %26 : vector<4x16xi1>
    %cst_15 = arith.constant -1.000000e+30 : f32
    %28 = vector.shape_cast %19 : vector<1x16xf32> to vector<1x16xf32>
    %29 = vector.broadcast %28 : vector<1x16xf32> to vector<4x16xf32>
    %30 = vector.broadcast %cst_15 : f32 to vector<4x16xf32>
    %31 = arith.select %27, %29, %30 : vector<4x16xi1>, vector<4x16xf32>
    %cst_16 = arith.constant dense<0xFF800000> : vector<4xf32>
    %32 = vector.multi_reduction <maximumf>, %31, %cst_16 [1] : vector<4x16xf32> to vector<4xf32>
    %33 = vector.shape_cast %32 : vector<4xf32> to vector<4x1xf32>
    %34 = vector.broadcast %33 : vector<4x1xf32> to vector<4x16xf32>
    %35 = arith.subf %31, %34 : vector<4x16xf32>
    %36 = math.exp %35 : vector<4x16xf32>
    %cst_17 = arith.constant 0.000000e+00 : f32
    %37 = vector.broadcast %cst_17 : f32 to vector<4x16xf32>
    %38 = arith.select %27, %36, %37 : vector<4x16xi1>, vector<4x16xf32>
    %cst_18 = arith.constant dense<0.000000e+00> : vector<4xf32>
    %39 = vector.multi_reduction <add>, %38, %cst_18 [1] : vector<4x16xf32> to vector<4xf32>
    %40 = vector.shape_cast %39 : vector<4xf32> to vector<4x1xf32>
    %cst_19 = arith.constant 1.000000e-30 : f32
    %41 = vector.broadcast %cst_19 : f32 to vector<4x1xf32>
    %42 = arith.maximumf %40, %41 : vector<4x1xf32>
    %43 = tpu.reciprocal %42 {approx = true} : vector<4x1xf32> -> vector<4x1xf32>
    %44 = vector.broadcast %43 : vector<4x1xf32> to vector<4x16xf32>
    %45 = arith.mulf %38, %44 : vector<4x16xf32>
    %cst_20 = arith.constant dense<0.000000e+00> : vector<4x32xf32>
    %46 = tpu.matmul %45, %0, %cst_20 {dimension_numbers = #tpu.dot_dimension_numbers<[1], [0], [0], [1], [0, 0, 1, 1], [], []>} : vector<4x16xf32>, vector<16x32xf32>, vector<4x32xf32> -> vector<4x32xf32>
    %c0_21 = arith.constant 0 : index
    %c0_22 = arith.constant 0 : index
    %47 = vector.load %arg6[%c0_21, %c0_22] : memref<32x4xf32, #tpu.memory_space<vmem>>, vector<32x4xf32>
    %cst_23 = arith.constant dense<0.000000e+00> : vector<4x4xf32>
    %48 = tpu.matmul %46, %47, %cst_23 {dimension_numbers = #tpu.dot_dimension_numbers<[1], [0], [0], [1], [0, 0, 1, 1], [], []>} : vector<4x32xf32>, vector<32x4xf32>, vector<4x4xf32> -> vector<4x4xf32>
    %c0_24 = arith.constant 0 : index
    %c0_25 = arith.constant 0 : index
    %49 = vector.load %arg7[%c0_24, %c0_25] : memref<1x4xf32, #tpu.memory_space<vmem>>, vector<1x4xf32>
    %50 = vector.broadcast %49 : vector<1x4xf32> to vector<4x4xf32>
    %51 = arith.addf %48, %50 : vector<4x4xf32>
    %cst_26 = arith.constant 0.000000e+00 : f32
    %52 = vector.broadcast %cst_26 : f32 to vector<4x4xf32>
    %53 = arith.maximumf %51, %52 : vector<4x4xf32>
    %c0_27 = arith.constant 0 : index
    %c0_28 = arith.constant 0 : index
    %54 = vector.load %arg8[%c0_27, %c0_28] : memref<1x4xf32, #tpu.memory_space<vmem>>, vector<1x4xf32>
    %cst_29 = arith.constant dense<0.000000e+00> : vector<1x4xf32>
    %55 = tpu.matmul %54, %53, %cst_29 {dimension_numbers = #tpu.dot_dimension_numbers<[1], [1], [0], [0], [0, 0, 1, 0], [], []>} : vector<1x4xf32>, vector<4x4xf32>, vector<1x4xf32> -> vector<1x4xf32>
    %c0_30 = arith.constant 0 : index
    %c0_31 = arith.constant 0 : index
    %56 = vector.load %arg9[%c0_30, %c0_31] : memref<1x1xf32, #tpu.memory_space<vmem>>, vector<1x1xf32>
    %57 = vector.broadcast %56 : vector<1x1xf32> to vector<1x4xf32>
    %58 = arith.addf %55, %57 : vector<1x4xf32>
    %cst_32 = arith.constant 0.000000e+00 : f32
    %59 = vector.broadcast %cst_32 : f32 to vector<1x4xf32>
    %60 = arith.maximumf %58, %59 : vector<1x4xf32>
    %c0_33 = arith.constant 0 : index
    %c0_34 = arith.constant 0 : index
    %61 = vector.load %arg12[%c0_33, %c0_34] : memref<1x4xf32, #tpu.memory_space<vmem>>, vector<1x4xf32>
    tpu.vector_store %arg12[%c0_33, %c0_34], %60 {strides = array<i32>} : memref<1x4xf32, #tpu.memory_space<vmem>>, vector<1x4xf32>,
    return
  }
  func.func @transform_0(%arg0: i32) -> (i32, i32) {
    %c0_i32 = arith.constant 0 : i32
    %c0_i32_0 = arith.constant 0 : i32
    %c0_i32_1 = arith.constant 0 : i32
    return %c0_i32, %c0_i32_0 : i32, i32
  }
  func.func @transform_1(%arg0: i32) -> (i32, i32) {
    %c0_i32 = arith.constant 0 : i32
    %c0_i32_0 = arith.constant 0 : i32
    %c0_i32_1 = arith.constant 0 : i32
    return %c0_i32, %c0_i32_0 : i32, i32
  }
  func.func @transform_2(%arg0: i32) -> (i32, i32) {
    %c0_i32 = arith.constant 0 : i32
    %c0_i32_0 = arith.constant 0 : i32
    %c0_i32_1 = arith.constant 0 : i32
    return %c0_i32, %c0_i32_0 : i32, i32
  }
  func.func @transform_3(%arg0: i32) -> (i32, i32) {
    %c0_i32 = arith.constant 0 : i32
    %c0_i32_0 = arith.constant 0 : i32
    %c0_i32_1 = arith.constant 0 : i32
    return %c0_i32, %c0_i32_0 : i32, i32
  }
  func.func @transform_4(%arg0: i32) -> (i32, i32) {
    %c0_i32 = arith.constant 0 : i32
    %c0_i32_0 = arith.constant 0 : i32
    %c0_i32_1 = arith.constant 0 : i32
    return %c0_i32, %c0_i32_0 : i32, i32
  }
  func.func @transform_5(%arg0: i32) -> (i32, i32) {
    %c0_i32 = arith.constant 0 : i32
    %c0_i32_0 = arith.constant 0 : i32
    %c0_i32_1 = arith.constant 0 : i32
    return %c0_i32, %c0_i32_0 : i32, i32
  }
  func.func @transform_6(%arg0: i32) -> (i32, i32) {
    %c0_i32 = arith.constant 0 : i32
    %c0_i32_0 = arith.constant 0 : i32
    %c0_i32_1 = arith.constant 0 : i32
    return %c0_i32, %c0_i32_0 : i32, i32
  }
  func.func @transform_7(%arg0: i32) -> (i32, i32) {
    %c0_i32 = arith.constant 0 : i32
    %c0_i32_0 = arith.constant 0 : i32
    %c0_i32_1 = arith.constant 0 : i32
    return %c0_i32, %c0_i32_0 : i32, i32
  }
  func.func @transform_8(%arg0: i32) -> (i32, i32) {
    %c0_i32 = arith.constant 0 : i32
    %c0_i32_0 = arith.constant 0 : i32
    %c0_i32_1 = arith.constant 0 : i32
    return %c0_i32, %c0_i32_0 : i32, i32
  }
  func.func @transform_9(%arg0: i32) -> (i32, i32) {
    %c0_i32 = arith.constant 0 : i32
    %c0_i32_0 = arith.constant 0 : i32
    %c0_i32_1 = arith.constant 0 : i32
    return %c0_i32, %c0_i32_0 : i32, i32
  }
  func.func @transform_10(%arg0: i32) -> (i32, i32) {
    %c0_i32 = arith.constant 0 : i32
    %c0_i32_0 = arith.constant 0 : i32
    %c0_i32_1 = arith.constant 0 : i32
    return %c0_i32, %c0_i32_0 : i32, i32
  }
  func.func @transform_11(%arg0: i32) -> (i32, i32) {
    %c0_i32 = arith.constant 0 : i32
    %c0_i32_0 = arith.constant 0 : i32
    %c0_i32_1 = arith.constant 0 : i32
    return %c0_i32, %c0_i32_0 : i32, i32
  }
}

</mosaic_0001>

<llo_original>
// kernel: tpu_custom_call.1
$region0: #{tpu_custom_call.1}
  #allocation0 [shape = 'u32[]', space=smem, size = 0x4, offset = 0x4, fixed_abs, tag = 'smem constant byte address 0x4 - core index']
  #allocation1 [shape = 'u32[144,128]{1,0:T(1,128)}', space=vmem, size = 0x12000, scoped, tag = 'internal scratch']
  #allocation2 [shape = 'f32[1,1]{1,0:T(1,128)S(1)}', space=vmem, size = 0x200, scoped, tag = 'scoped memory for tpu_custom_call.1']
  #allocation3 [shape = 'f32[1,1]{1,0:T(1,128)S(1)}', space=vmem, size = 0x200, scoped, tag = 'scoped memory for tpu_custom_call.1']
  %s0 = inlined_call_operand.vmem [shape: f32[16,32], index: 0, kind: input, shape index: {}]
  %s1 = inlined_call_operand.vmem [shape: f32[32,32], index: 1, kind: input, shape index: {}]
  %s2 = inlined_call_operand.vmem [shape: f32[1,32], index: 2, kind: input, shape index: {}]
  %s3 = inlined_call_operand.vmem [shape: f32[1,16], index: 3, kind: input, shape index: {}]
  %s4 = inlined_call_operand.<no memory space> [shape: f32[1,1], index: 4, kind: input, shape index: {}]
  %s5 = inlined_call_operand.vmem [shape: f32[32,4], index: 5, kind: input, shape index: {}]
  %s6 = inlined_call_operand.vmem [shape: f32[1,4], index: 6, kind: input, shape index: {}]
  %s7 = inlined_call_operand.vmem [shape: f32[1,4], index: 7, kind: input, shape index: {}]
  %s8 = inlined_call_operand.<no memory space> [shape: f32[1,1], index: 8, kind: input, shape index: {}]
  %s9 = inlined_call_operand.vmem [shape: s32[4,1], index: 9, kind: input, shape index: {}]
  %s10 = inlined_call_operand.vmem [shape: s32[4,1], index: 10, kind: input, shape index: {}]
  %s11 = inlined_call_operand.hbm [shape: f32[1,4], index: 11, kind: output, shape index: {}]
  %s12 = sld [smem:[#allocation0]]
  $region54: #{tpu_custom_call.1} parent=0
    _
  %s14 = ssub.s32 1, %s12
  %s15 = scalar_select 0, %s14, %s12
  %v16 = vstv %s4
  %17 = vst [vmem:[#allocation2] sm:$0x1] %v16
  %v18 = vstv %s8
  %19 = vst [vmem:[#allocation3] sm:$0x1] %v18
  $region1: #{tpu_custom_call.1} parent=0
    #allocation4 [shape = 'u8[512]{0}', space=vmem, size = 0x400, scoped, tag = 'output window, operand 0, single buffered']
    #allocation5 [shape = 's32[1]{0}', space=sflag, size = 0x4, scoped, tag = 'scoped memory for tpu_custom_call.1']
    %20 = vsyncpa [#allocation5], 0
    // Predicated region
    $region2: #{tpu_custom_call.1} parent=1 // pred_check
      _
    $region3: #{tpu_custom_call.1} parent=1 // pred_check_branch
      %22 = sbr.rel (0) target = $region5
    $region4: #{tpu_custom_call.1} parent=1 // pred_region
      _
    $region5: #{tpu_custom_call.1} parent=1 // pred_fallthru
      _
    // Predicated region
    $region6: #{tpu_custom_call.1} parent=1 // pred_check
      _
    $region7: #{tpu_custom_call.1} parent=1 // pred_check_branch
      %24 = sbr.rel (0) target = $region9
    $region8: #{tpu_custom_call.1} parent=1 // pred_region
      _
    $region9: #{tpu_custom_call.1} parent=1 // pred_fallthru
      _
    // Predicated region
    $region10: #{tpu_custom_call.1} parent=1 // pred_check
      _
    $region11: #{tpu_custom_call.1} parent=1 // pred_check_branch
      %26 = sbr.rel (0) target = $region13
    $region12: #{tpu_custom_call.1} parent=1 // pred_region
      _
    $region13: #{tpu_custom_call.1} parent=1 // pred_fallthru
      _
    // Predicated region
    $region14: #{tpu_custom_call.1} parent=1 // pred_check
      _
    $region15: #{tpu_custom_call.1} parent=1 // pred_check_branch
      %28 = sbr.rel (0) target = $region17
    $region16: #{tpu_custom_call.1} parent=1 // pred_region
      _
    $region17: #{tpu_custom_call.1} parent=1 // pred_fallthru
      _
    // Predicated region
    $region18: #{tpu_custom_call.1} parent=1 // pred_check
      _
    $region19: #{tpu_custom_call.1} parent=1 // pred_check_branch
      %30 = sbr.rel (0) target = $region21
    $region20: #{tpu_custom_call.1} parent=1 // pred_region
      _
    $region21: #{tpu_custom_call.1} parent=1 // pred_fallthru
      _
    // Predicated region
    $region22: #{tpu_custom_call.1} parent=1 // pred_check
      _
    $region23: #{tpu_custom_call.1} parent=1 // pred_check_branch
      %32 = sbr.rel (0) target = $region25
    $region24: #{tpu_custom_call.1} parent=1 // pred_region
      _
    $region25: #{tpu_custom_call.1} parent=1 // pred_fallthru
      _
    // Predicated region
    $region26: #{tpu_custom_call.1} parent=1 // pred_check
      _
    $region27: #{tpu_custom_call.1} parent=1 // pred_check_branch
      %34 = sbr.rel (0) target = $region29
    $region28: #{tpu_custom_call.1} parent=1 // pred_region
      _
    $region29: #{tpu_custom_call.1} parent=1 // pred_fallthru
      _
    // Predicated region
    $region30: #{tpu_custom_call.1} parent=1 // pred_check
      _
    $region31: #{tpu_custom_call.1} parent=1 // pred_check_branch
      %36 = sbr.rel (0) target = $region33
    $region32: #{tpu_custom_call.1} parent=1 // pred_region
      _
    $region33: #{tpu_custom_call.1} parent=1 // pred_fallthru
      _
    // Predicated region
    $region34: #{tpu_custom_call.1} parent=1 // pred_check
      _
    $region35: #{tpu_custom_call.1} parent=1 // pred_check_branch
      %38 = sbr.rel (0) target = $region37
    $region36: #{tpu_custom_call.1} parent=1 // pred_region
      _
    $region37: #{tpu_custom_call.1} parent=1 // pred_fallthru
      _
    // Predicated region
    $region38: #{tpu_custom_call.1} parent=1 // pred_check
      _
    $region39: #{tpu_custom_call.1} parent=1 // pred_check_branch
      %40 = sbr.rel (0) target = $region41
    $region40: #{tpu_custom_call.1} parent=1 // pred_region
      _
    $region41: #{tpu_custom_call.1} parent=1 // pred_fallthru
      _
    // Predicated region
    $region42: #{tpu_custom_call.1} parent=1 // pred_check
      _
    $region43: #{tpu_custom_call.1} parent=1 // pred_check_branch
      %42 = sbr.rel (0) target = $region45
    $region44: #{tpu_custom_call.1} parent=1 // pred_region
      _
    $region45: #{tpu_custom_call.1} parent=1 // pred_fallthru
      _
    %v43 = vld [vmem:[%s0] sm:$0xff]
    %v44 = vld [vmem:[%s0 + $0x8] sm:$0xff]
    %v45 = vld [vmem:[%s1] sm:$0xff]
    %v46 = vld [vmem:[%s1 + $0x8] sm:$0xff]
    %v47 = vld [vmem:[%s1 + $0x10] sm:$0xff]
    %v48 = vld [vmem:[%s1 + $0x18] sm:$0xff]
    %v49 = vld [vmem:[%s2] sm:$0x1]
    %v51 = vlaneseq
    %v52 = vshrl.u32 %v51, 7
    %v53 = vsub.s32 0, %v52
    %v54 = vrot.slane %v49, %v53
    %vm56 = vcmask 261120
    %v58 = vsel %vm56, %v43, 0
    %v61 = vsel %vm56, %v44, 0
    %63 = vmatprep.subr.mxu0 0.0
    %64 = vmatpush1.msra.mxu0 %v45
    %65 = vmatprep.subr.mxu0 0.0
    %66 = vmatpush1.msra.mxu0 %v46
    %67 = vmatprep.subr.mxu0 0.0
    %68 = vmatpush1.msra.mxu0 %v47
    %69 = vmatprep.subr.mxu0 0.0
    %70 = vmatpush1.msra.mxu0 %v48
    %71 = vmatprep.subr.mxu0 0.0
    %72 = vmatpush1.msra.mxu0 0.0
    %73 = vmatprep.subr.mxu0 0.0
    %74 = vmatpush1.msra.mxu0 0.0
    %75 = vmatprep.subr.mxu0 0.0
    %76 = vmatpush1.msra.mxu0 0.0
    %77 = vmatprep.subr.mxu0 0.0
    %78 = vmatpush1.msra.mxu0 0.0
    %79 = vmatprep.subr.mxu0 0.0
    %80 = vmatpush1.msra.mxu0 0.0
    %81 = vmatprep.subr.mxu0 0.0
    %82 = vmatpush1.msra.mxu0 0.0
    %83 = vmatprep.subr.mxu0 0.0
    %84 = vmatpush1.msra.mxu0 0.0
    %85 = vmatprep.subr.mxu0 0.0
    %86 = vmatpush1.msra.mxu0 0.0
    %87 = vmatprep.subr.mxu0 0.0
    %88 = vmatpush1.msra.mxu0 0.0
    %89 = vmatprep.subr.mxu0 0.0
    %90 = vmatpush1.msra.mxu0 0.0
    %91 = vmatprep.subr.mxu0 0.0
    %92 = vmatpush1.msra.mxu0 0.0
    %93 = vmatprep.subr.mxu0 0.0
    %94 = vmatpush1.msra.mxu0 0.0
    %95 = vmatprep.subr.mxu0 0.0
    %96 = vmatpush1.msra.mxu0 0.0
    %97 = vmatprep.subr.mxu0 0.0
    %98 = vmatpush1.msra.mxu0 0.0
    %99 = vmatprep.subr.mxu0 0.0
    %100 = vmatpush1.msra.mxu0 0.0
    %101 = vmatprep.subr.mxu0 0.0
    %102 = vmatpush1.msra.mxu0 0.0
    %103 = vmatprep.subr.mxu0 0.0
    %104 = vmatpush1.msra.mxu0 0.0
    %105 = vmatprep.subr.mxu0 0.0
    %106 = vmatpush1.msra.mxu0 0.0
    %107 = vmatprep.subr.mxu0 0.0
    %108 = vmatpush1.msra.mxu0 0.0
    %109 = vmatprep.subr.mxu0 0.0
    %110 = vmatpush1.msra.mxu0 0.0
    %111 = vmatprep.subr.mxu0 0.0
    %112 = vmatpush1.msra.mxu0 0.0
    %113 = vmatprep.subr.mxu0 0.0
    %114 = vmatpush1.msra.mxu0 0.0
    %115 = vmatprep.subr.mxu0 0.0
    %116 = vmatpush1.msra.mxu0 0.0
    %117 = vmatprep.subr.mxu0 0.0
    %118 = vmatpush1.msra.mxu0 0.0
    %119 = vmatprep.subr.mxu0 0.0
    %120 = vmatpush1.msra.mxu0 0.0
    %121 = vmatprep.subr.mxu0 0.0
    %122 = vmatpush1.msra.mxu0 0.0
    %123 = vmatprep.subr.mxu0 0.0
    %124 = vmatpush1.msra.mxu0 0.0
    %125 = vmatprep.subr.mxu0 0.0
    %126 = vmatpush1.msra.mxu0 0.0
    %127 = vmatprep.mubr.f32.mxu0 0.0
    %128 = vmatmul.mubr.f32.gmra.mrb[0].mxu0 %v58
    %v129 = vpop.f32.mrb[0].mxu0
    %v130 = vadd.f32 %v54, %v129
    %v131 = vpop.f32.mrb[0].mxu0
    %132 = vmatprep.mubr.f32.mxu0 0.0
    %133 = vmatmul.mubr.f32.gmra.mrb[0].mxu0 %v61
    %v134 = vpop.f32.mrb[0].mxu0
    %v135 = vadd.f32 %v54, %v134
    %v136 = vpop.f32.mrb[0].mxu0
    %137 = vdwg.mxu0
    %v138 = vtanh.pop %v130
    %v139 = vtanh.pop %v135
    %v140 = vxor.u32 %v130, 2147483648
    %v141 = vxor.u32 %v135, 2147483648
    %v142 = vmul.f32 %v140, 1.442695
    %v143 = vpow.pop %v142
    %v144 = vmul.f32 %v141, 1.442695
    %v145 = vpow.pop %v144
    %v146 = vadd.f32 %v143, 1.0
    %v147 = vadd.f32 %v145, 1.0
    %v148 = vrcp.pop %v146
    %v149 = vmul.f32 1.0, %v148
    %v150 = vrcp.pop %v147
    %v151 = vmul.f32 1.0, %v150
    %154 = vrot.lane.b32.xlu0 %v149, 112
    %v155 = vpop.permute.xlu0 %154
    %156 = vrot.lane.b32.xlu0 %v151, 112
    %v157 = vpop.permute.xlu0 %156
    %v160 = vmul.f32 %v138, %v155
    %v161 = vmul.f32 %v139, %v157
    %v162 = vld [vmem:[%s3] sm:$0x1]
    %v163 = vld [vmem:[#allocation2] sm:$0x1]
    %165 = vset.pattern.permute.xlu0 0
    %166 = vperm.xlu0 %165, %v163
    %v167 = vpop.permute.xlu0 %166
    %v169 = vlaneseq
    %v170 = vshrl.u32 %v169, 7
    %v171 = vsub.s32 0, %v170
    %v172 = vrot.slane %v167, %v171
    %vm173 = vcmask 130048
    %v175 = vsel %vm173, %v162, 0
    %v178 = vsel %vm173, %v160, 0
    %v181 = vsel %vm173, %v161, 0
    %183 = vmatprep.subr.mxu0 0.0
    %184 = vmatpush1.xpose.msra.mxu0 %v178
    %185 = vmatprep.subr.mxu0 0.0
    %186 = vmatpush1.xpose.msra.mxu0 %v181
    %187 = vmatprep.subr.mxu0 0.0
    %188 = vmatpush1.xpose.msra.mxu0 0.0
    %189 = vmatprep.subr.mxu0 0.0
    %190 = vmatpush1.xpose.msra.mxu0 0.0
    %191 = vmatprep.subr.mxu0 0.0
    %192 = vmatpush1.xpose.msra.mxu0 0.0
    %193 = vmatprep.subr.mxu0 0.0
    %194 = vmatpush1.xpose.msra.mxu0 0.0
    %195 = vmatprep.subr.mxu0 0.0
    %196 = vmatpush1.xpose.msra.mxu0 0.0
    %197 = vmatprep.subr.mxu0 0.0
    %198 = vmatpush1.xpose.msra.mxu0 0.0
    %199 = vmatprep.subr.mxu0 0.0
    %200 = vmatpush1.xpose.msra.mxu0 0.0
    %201 = vmatprep.subr.mxu0 0.0
    %202 = vmatpush1.xpose.msra.mxu0 0.0
    %203 = vmatprep.subr.mxu0 0.0
    %204 = vmatpush1.xpose.msra.mxu0 0.0
    %205 = vmatprep.subr.mxu0 0.0
    %206 = vmatpush1.xpose.msra.mxu0 0.0
    %207 = vmatprep.subr.mxu0 0.0
    %208 = vmatpush1.xpose.msra.mxu0 0.0
    %209 = vmatprep.subr.mxu0 0.0
    %210 = vmatpush1.xpose.msra.mxu0 0.0
    %211 = vmatprep.subr.mxu0 0.0
    %212 = vmatpush1.xpose.msra.mxu0 0.0
    %213 = vmatprep.subr.mxu0 0.0
    %214 = vmatpush1.xpose.msra.mxu0 0.0
    %215 = vmatprep.subr.mxu0 0.0
    %216 = vmatpush1.xpose.msra.mxu0 0.0
    %217 = vmatprep.subr.mxu0 0.0
    %218 = vmatpush1.xpose.msra.mxu0 0.0
    %219 = vmatprep.subr.mxu0 0.0
    %220 = vmatpush1.xpose.msra.mxu0 0.0
    %221 = vmatprep.subr.mxu0 0.0
    %222 = vmatpush1.xpose.msra.mxu0 0.0
    %223 = vmatprep.subr.mxu0 0.0
    %224 = vmatpush1.xpose.msra.mxu0 0.0
    %225 = vmatprep.subr.mxu0 0.0
    %226 = vmatpush1.xpose.msra.mxu0 0.0
    %227 = vmatprep.subr.mxu0 0.0
    %228 = vmatpush1.xpose.msra.mxu0 0.0
    %229 = vmatprep.subr.mxu0 0.0
    %230 = vmatpush1.xpose.msra.mxu0 0.0
    %231 = vmatprep.subr.mxu0 0.0
    %232 = vmatpush1.xpose.msra.mxu0 0.0
    %233 = vmatprep.subr.mxu0 0.0
    %234 = vmatpush1.xpose.msra.mxu0 0.0
    %235 = vmatprep.subr.mxu0 0.0
    %236 = vmatpush1.xpose.msra.mxu0 0.0
    %237 = vmatprep.subr.mxu0 0.0
    %238 = vmatpush1.xpose.msra.mxu0 0.0
    %239 = vmatprep.subr.mxu0 0.0
    %240 = vmatpush1.xpose.msra.mxu0 0.0
    %241 = vmatprep.subr.mxu0 0.0
    %242 = vmatpush1.xpose.msra.mxu0 0.0
    %243 = vmatprep.subr.mxu0 0.0
    %244 = vmatpush1.xpose.msra.mxu0 0.0
    %245 = vmatprep.subr.mxu0 0.0
    %246 = vmatpush1.xpose.msra.mxu0 0.0
    %247 = vmatprep.mubr.f32.mxu0 0.0
    %248 = vmatmul.mubr.f32.gmra.mrb[0].mxu0 %v175
    %v249 = vpop.f32.mrb[0].mxu0
    %v250 = vadd.f32 %v172, %v249
    %v251 = vpop.f32.mrb[0].mxu0
    %252 = vdwg.mxu0
    %v253 = vlaneseq
    %v254 = vand.u32 %v253, 127
    %v255 = vld [vmem:[%s9] sm:$0xf]
    %256 = vset.pattern.permute.xlu0 0
    %257 = vperm.xlu0 %256, %v255
    %v258 = vpop.permute.xlu0 %257
    %vm259 = vcmp.ge.s32.totalorder %v254, %v258
    %v260 = vld [vmem:[%s10] sm:$0xf]
    %261 = vset.pattern.permute.xlu0 0
    %262 = vperm.xlu0 %261, %v260
    %v263 = vpop.permute.xlu0 %262
    %vm264 = vcmp.lt.s32.totalorder %v254, %v263
    %vm265 = vmand %vm259, %vm264
    %v266 = vlaneseq
    %v267 = vshrl.u32 %v266, 7
    %v268 = vsub.s32 0, %v267
    %v269 = vrot.slane %v250, %v268
    %v270 = vsel %vm265, %v269, -1e+30
    %vm271 = vcmask 125952
    %v272 = vsel %vm271, %v270, -inf
    %273 = vmax.xlane.f32.xlu0 %v272
    %v274 = vpop.xlane.xlu0 %273
    %v275 = vsub.f32 %v270, %v274
    %v276 = vmul.f32 %v275, 1.442695
    %v277 = vpow.pop %v276
    %v278 = vsel %vm265, %v277, 0.0
    %v279 = vsel %vm271, %v278, 0.0
    %280 = vadd.xlane.f32.xlu0 %v279
    %v281 = vpop.xlane.xlu0 %280
    %v282 = vmax.f32 %v281, 1e-30
    %v283 = vrcp.pop %v282
    %v284 = vmul.f32 %v278, %v283
    %v286 = vsel %vm173, %v284, 0
    %288 = vmatprep.subr.mxu0 0.0
    %289 = vmatpush1.msra.mxu0 %v43
    %290 = vmatprep.subr.mxu0 0.0
    %291 = vmatpush1.msra.mxu0 %v44
    %292 = vmatprep.subr.mxu0 0.0
    %293 = vmatpush1.msra.mxu0 0.0
    %294 = vmatprep.subr.mxu0 0.0
    %295 = vmatpush1.msra.mxu0 0.0
    %296 = vmatprep.subr.mxu0 0.0
    %297 = vmatpush1.msra.mxu0 0.0
    %298 = vmatprep.subr.mxu0 0.0
    %299 = vmatpush1.msra.mxu0 0.0
    %300 = vmatprep.subr.mxu0 0.0
    %301 = vmatpush1.msra.mxu0 0.0
    %302 = vmatprep.subr.mxu0 0.0
    %303 = vmatpush1.msra.mxu0 0.0
    %304 = vmatprep.subr.mxu0 0.0
    %305 = vmatpush1.msra.mxu0 0.0
    %306 = vmatprep.subr.mxu0 0.0
    %307 = vmatpush1.msra.mxu0 0.0
    %308 = vmatprep.subr.mxu0 0.0
    %309 = vmatpush1.msra.mxu0 0.0
    %310 = vmatprep.subr.mxu0 0.0
    %311 = vmatpush1.msra.mxu0 0.0
    %312 = vmatprep.subr.mxu0 0.0
    %313 = vmatpush1.msra.mxu0 0.0
    %314 = vmatprep.subr.mxu0 0.0
    %315 = vmatpush1.msra.mxu0 0.0
    %316 = vmatprep.subr.mxu0 0.0
    %317 = vmatpush1.msra.mxu0 0.0
    %318 = vmatprep.subr.mxu0 0.0
    %319 = vmatpush1.msra.mxu0 0.0
    %320 = vmatprep.subr.mxu0 0.0
    %321 = vmatpush1.msra.mxu0 0.0
    %322 = vmatprep.subr.mxu0 0.0
    %323 = vmatpush1.msra.mxu0 0.0
    %324 = vmatprep.subr.mxu0 0.0
    %325 = vmatpush1.msra.mxu0 0.0
    %326 = vmatprep.subr.mxu0 0.0
    %327 = vmatpush1.msra.mxu0 0.0
    %328 = vmatprep.subr.mxu0 0.0
    %329 = vmatpush1.msra.mxu0 0.0
    %330 = vmatprep.subr.mxu0 0.0
    %331 = vmatpush1.msra.mxu0 0.0
    %332 = vmatprep.subr.mxu0 0.0
    %333 = vmatpush1.msra.mxu0 0.0
    %334 = vmatprep.subr.mxu0 0.0
    %335 = vmatpush1.msra.mxu0 0.0
    %336 = vmatprep.subr.mxu0 0.0
    %337 = vmatpush1.msra.mxu0 0.0
    %338 = vmatprep.subr.mxu0 0.0
    %339 = vmatpush1.msra.mxu0 0.0
    %340 = vmatprep.subr.mxu0 0.0
    %341 = vmatpush1.msra.mxu0 0.0
    %342 = vmatprep.subr.mxu0 0.0
    %343 = vmatpush1.msra.mxu0 0.0
    %344 = vmatprep.subr.mxu0 0.0
    %345 = vmatpush1.msra.mxu0 0.0
    %346 = vmatprep.subr.mxu0 0.0
    %347 = vmatpush1.msra.mxu0 0.0
    %348 = vmatprep.subr.mxu0 0.0
    %349 = vmatpush1.msra.mxu0 0.0
    %350 = vmatprep.subr.mxu0 0.0
    %351 = vmatpush1.msra.mxu0 0.0
    %352 = vmatprep.mubr.f32.mxu0 0.0
    %353 = vmatmul.mubr.f32.gmra.mrb[0].mxu0 %v286
    %v354 = vpop.f32.mrb[0].mxu0
    %v355 = vadd.f32 0.0, %v354
    %v356 = vpop.f32.mrb[0].mxu0
    %357 = vdwg.mxu0
    %v358 = vld [vmem:[%s5] sm:$0xff]
    %v359 = vld [vmem:[%s5 + $0x8] sm:$0xff]
    %v360 = vld [vmem:[%s5 + $0x10] sm:$0xff]
    %v361 = vld [vmem:[%s5 + $0x18] sm:$0xff]
    %v362 = vld [vmem:[%s6] sm:$0x1]
    %v364 = vlaneseq
    %v365 = vshrl.u32 %v364, 7
    %v366 = vsub.s32 0, %v365
    %v367 = vrot.slane %v362, %v366
    %v370 = vsel %vm56, %v355, 0
    %372 = vmatprep.subr.mxu0 0.0
    %373 = vmatpush1.msra.mxu0 %v358
    %374 = vmatprep.subr.mxu0 0.0
    %375 = vmatpush1.msra.mxu0 %v359
    %376 = vmatprep.subr.mxu0 0.0
    %377 = vmatpush1.msra.mxu0 %v360
    %378 = vmatprep.subr.mxu0 0.0
    %379 = vmatpush1.msra.mxu0 %v361
    %380 = vmatprep.subr.mxu0 0.0
    %381 = vmatpush1.msra.mxu0 0.0
    %382 = vmatprep.subr.mxu0 0.0
    %383 = vmatpush1.msra.mxu0 0.0
    %384 = vmatprep.subr.mxu0 0.0
    %385 = vmatpush1.msra.mxu0 0.0
    %386 = vmatprep.subr.mxu0 0.0
    %387 = vmatpush1.msra.mxu0 0.0
    %388 = vmatprep.subr.mxu0 0.0
    %389 = vmatpush1.msra.mxu0 0.0
    %390 = vmatprep.subr.mxu0 0.0
    %391 = vmatpush1.msra.mxu0 0.0
    %392 = vmatprep.subr.mxu0 0.0
    %393 = vmatpush1.msra.mxu0 0.0
    %394 = vmatprep.subr.mxu0 0.0
    %395 = vmatpush1.msra.mxu0 0.0
    %396 = vmatprep.subr.mxu0 0.0
    %397 = vmatpush1.msra.mxu0 0.0
    %398 = vmatprep.subr.mxu0 0.0
    %399 = vmatpush1.msra.mxu0 0.0
    %400 = vmatprep.subr.mxu0 0.0
    %401 = vmatpush1.msra.mxu0 0.0
    %402 = vmatprep.subr.mxu0 0.0
    %403 = vmatpush1.msra.mxu0 0.0
    %404 = vmatprep.subr.mxu0 0.0
    %405 = vmatpush1.msra.mxu0 0.0
    %406 = vmatprep.subr.mxu0 0.0
    %407 = vmatpush1.msra.mxu0 0.0
    %408 = vmatprep.subr.mxu0 0.0
    %409 = vmatpush1.msra.mxu0 0.0
    %410 = vmatprep.subr.mxu0 0.0
    %411 = vmatpush1.msra.mxu0 0.0
    %412 = vmatprep.subr.mxu0 0.0
    %413 = vmatpush1.msra.mxu0 0.0
    %414 = vmatprep.subr.mxu0 0.0
    %415 = vmatpush1.msra.mxu0 0.0
    %416 = vmatprep.subr.mxu0 0.0
    %417 = vmatpush1.msra.mxu0 0.0
    %418 = vmatprep.subr.mxu0 0.0
    %419 = vmatpush1.msra.mxu0 0.0
    %420 = vmatprep.subr.mxu0 0.0
    %421 = vmatpush1.msra.mxu0 0.0
    %422 = vmatprep.subr.mxu0 0.0
    %423 = vmatpush1.msra.mxu0 0.0
    %424 = vmatprep.subr.mxu0 0.0
    %425 = vmatpush1.msra.mxu0 0.0
    %426 = vmatprep.subr.mxu0 0.0
    %427 = vmatpush1.msra.mxu0 0.0
    %428 = vmatprep.subr.mxu0 0.0
    %429 = vmatpush1.msra.mxu0 0.0
    %430 = vmatprep.subr.mxu0 0.0
    %431 = vmatpush1.msra.mxu0 0.0
    %432 = vmatprep.subr.mxu0 0.0
    %433 = vmatpush1.msra.mxu0 0.0
    %434 = vmatprep.subr.mxu0 0.0
    %435 = vmatpush1.msra.mxu0 0.0
    %436 = vmatprep.mubr.f32.mxu0 0.0
    %437 = vmatmul.mubr.f32.gmra.mrb[0].mxu0 %v370
    %v438 = vpop.f32.mrb[0].mxu0
    %v439 = vadd.f32 %v367, %v438
    %v440 = vpop.f32.mrb[0].mxu0
    %441 = vdwg.mxu0
    %v442 = vmax.f32 %v439, 0.0
    %v443 = vld [vmem:[%s7] sm:$0x1]
    %v444 = vld [vmem:[#allocation3] sm:$0x1]
    %446 = vset.pattern.permute.xlu0 0
    %447 = vperm.xlu0 %446, %v444
    %v448 = vpop.permute.xlu0 %447
    %v450 = vlaneseq
    %v451 = vshrl.u32 %v450, 7
    %v452 = vsub.s32 0, %v451
    %v453 = vrot.slane %v448, %v452
    %vm454 = vcmask 31744
    %v456 = vsel %vm454, %v443, 0
    %v459 = vsel %vm454, %v442, 0
    %461 = vmatprep.subr.mxu0 0.0
    %462 = vmatpush1.xpose.msra.mxu0 %v459
    %463 = vmatprep.subr.mxu0 0.0
    %464 = vmatpush1.xpose.msra.mxu0 0.0
    %465 = vmatprep.subr.mxu0 0.0
    %466 = vmatpush1.xpose.msra.mxu0 0.0
    %467 = vmatprep.subr.mxu0 0.0
    %468 = vmatpush1.xpose.msra.mxu0 0.0
    %469 = vmatprep.subr.mxu0 0.0
    %470 = vmatpush1.xpose.msra.mxu0 0.0
    %471 = vmatprep.subr.mxu0 0.0
    %472 = vmatpush1.xpose.msra.mxu0 0.0
    %473 = vmatprep.subr.mxu0 0.0
    %474 = vmatpush1.xpose.msra.mxu0 0.0
    %475 = vmatprep.subr.mxu0 0.0
    %476 = vmatpush1.xpose.msra.mxu0 0.0
    %477 = vmatprep.subr.mxu0 0.0
    %478 = vmatpush1.xpose.msra.mxu0 0.0
    %479 = vmatprep.subr.mxu0 0.0
    %480 = vmatpush1.xpose.msra.mxu0 0.0
    %481 = vmatprep.subr.mxu0 0.0
    %482 = vmatpush1.xpose.msra.mxu0 0.0
    %483 = vmatprep.subr.mxu0 0.0
    %484 = vmatpush1.xpose.msra.mxu0 0.0
    %485 = vmatprep.subr.mxu0 0.0
    %486 = vmatpush1.xpose.msra.mxu0 0.0
    %487 = vmatprep.subr.mxu0 0.0
    %488 = vmatpush1.xpose.msra.mxu0 0.0
    %489 = vmatprep.subr.mxu0 0.0
    %490 = vmatpush1.xpose.msra.mxu0 0.0
    %491 = vmatprep.subr.mxu0 0.0
    %492 = vmatpush1.xpose.msra.mxu0 0.0
    %493 = vmatprep.subr.mxu0 0.0
    %494 = vmatpush1.xpose.msra.mxu0 0.0
    %495 = vmatprep.subr.mxu0 0.0
    %496 = vmatpush1.xpose.msra.mxu0 0.0
    %497 = vmatprep.subr.mxu0 0.0
    %498 = vmatpush1.xpose.msra.mxu0 0.0
    %499 = vmatprep.subr.mxu0 0.0
    %500 = vmatpush1.xpose.msra.mxu0 0.0
    %501 = vmatprep.subr.mxu0 0.0
    %502 = vmatpush1.xpose.msra.mxu0 0.0
    %503 = vmatprep.subr.mxu0 0.0
    %504 = vmatpush1.xpose.msra.mxu0 0.0
    %505 = vmatprep.subr.mxu0 0.0
    %506 = vmatpush1.xpose.msra.mxu0 0.0
    %507 = vmatprep.subr.mxu0 0.0
    %508 = vmatpush1.xpose.msra.mxu0 0.0
    %509 = vmatprep.subr.mxu0 0.0
    %510 = vmatpush1.xpose.msra.mxu0 0.0
    %511 = vmatprep.subr.mxu0 0.0
    %512 = vmatpush1.xpose.msra.mxu0 0.0
    %513 = vmatprep.subr.mxu0 0.0
    %514 = vmatpush1.xpose.msra.mxu0 0.0
    %515 = vmatprep.subr.mxu0 0.0
    %516 = vmatpush1.xpose.msra.mxu0 0.0
    %517 = vmatprep.subr.mxu0 0.0
    %518 = vmatpush1.xpose.msra.mxu0 0.0
    %519 = vmatprep.subr.mxu0 0.0
    %520 = vmatpush1.xpose.msra.mxu0 0.0
    %521 = vmatprep.subr.mxu0 0.0
    %522 = vmatpush1.xpose.msra.mxu0 0.0
    %523 = vmatprep.subr.mxu0 0.0
    %524 = vmatpush1.xpose.msra.mxu0 0.0
    %525 = vmatprep.mubr.f32.mxu0 0.0
    %526 = vmatmul.mubr.f32.gmra.mrb[0].mxu0 %v456
    %v527 = vpop.f32.mrb[0].mxu0
    %v528 = vadd.f32 %v453, %v527
    %v529 = vpop.f32.mrb[0].mxu0
    %530 = vdwg.mxu0
    %v531 = vmax.f32 %v528, 0.0
    %vm532 = vcmask 24576
    %533 = vst.msk [vmem:[#allocation4] sm:$0x1] %vm532, %v531
    // Predicated region
    $region46: #{tpu_custom_call.1} parent=1 // pred_check
      _
    $region47: #{tpu_custom_call.1} parent=1 // pred_check_branch
      %535 = sbr.rel (0) target = $region49
    $region48: #{tpu_custom_call.1} parent=1 // pred_region
      %s537 = ssub.s32 16, 16
      %538 = vsyncadd [#allocation5], %s537
      %s540 = sshll.u32 [#allocation4], 4
      %s541 = int_to_ptr.vmem [resolvable:$true] %s540
      %543 = dma.vmem_to_hbm [thread:$0]  %s541, 16, %s11, [#allocation5]
    $region49: #{tpu_custom_call.1} parent=1 // pred_fallthru
      _
    // Predicated region
    $region50: #{tpu_custom_call.1} parent=1 // pred_check
      _
    $region51: #{tpu_custom_call.1} parent=1 // pred_check_branch
      %545 = sbr.rel (0) target = $region53
    $region52: #{tpu_custom_call.1} parent=1 // pred_region
      %546 = dma.done [#allocation5], 16
    $region53: #{tpu_custom_call.1} parent=1 // pred_fallthru
      _
    %547 = vsyncpa [#allocation5], 1

</llo_original>
